<compile_context>
chip_gen: v7x
topology: tpu7x:2x2x1
jax: 0.10.0
libtpu: 0.0.40
codegen_flags: <defaults>
</compile_context>

<pallas_src>
import functools

import jax
import jax.numpy as jnp
from jax.experimental import pallas as pl
from jax.experimental.pallas import tpu as pltpu


def _round_up(x, m):
    return ((x + m - 1) // m) * m


# ----------------------------- tile selection ------------------------------

def _pick_tm(b):
    if b <= 512:
        return b                       # full-dim block: no M padding needed
    best = None
    for c in (512, 256, 128):
        key = (_round_up(b, c), -c)    # least padding, then largest tile
        if best is None or key < best[0]:
            best = (key, c)
    return best[1]


def _pick_tn(c_out):
    if c_out <= 512:
        return _round_up(c_out, 128)   # lane-dense single/few tiles
    best = None
    for c in (512, 384, 256, 128):
        key = (_round_up(c_out, c), -c)
        if best is None or key < best[0]:
            best = (key, c)
    return best[1]


def _pick_tk(c_in):
    if c_in <= 512:
        return c_in                    # full-dim block: no K padding of x
    for c in (512, 256, 128):
        if c_in % c == 0:
            return c                   # exact divisor: no K padding of x
    return 512


def _vmem_bytes(tm, tn, tk, in_bytes, out_bytes):
    x = 2 * 2 * tm * tk * in_bytes      # x_r, x_i, double-buffered
    w = 2 * 2 * tk * tn * in_bytes      # w_r, w_i, double-buffered
    b = 2 * 2 * tn * in_bytes           # biases
    o = 2 * 2 * tm * tn * out_bytes     # y_r, y_i, double-buffered
    acc = 2 * tm * tn * 4               # fp32 accumulators
    return x + w + b + o + acc


# --------------------------------- kernel ----------------------------------

def _linear_block_kernel(xr_ref, xi_ref, wr_ref, wi_ref, br_ref, bi_ref,
                         or_ref, oi_ref, accr_ref, acci_ref, *, act):
    """One (tm, tn) output tile of the complex linear (+ optional ReLU)."""
    k = pl.program_id(2)

    @pl.when(k == 0)
    def _():
        accr_ref[...] = jnp.zeros_like(accr_ref)
        acci_ref[...] = jnp.zeros_like(acci_ref)

    xr = xr_ref[...]
    xi = xi_ref[...]
    wr = wr_ref[...]
    wi = wi_ref[...]

    accr_ref[...] += (
        jnp.dot(xr, wr, preferred_element_type=jnp.float32)
        - jnp.dot(xi, wi, preferred_element_type=jnp.float32))
    acci_ref[...] += (
        jnp.dot(xr, wi, preferred_element_type=jnp.float32)
        + jnp.dot(xi, wr, preferred_element_type=jnp.float32))

    @pl.when(k == pl.num_programs(2) - 1)
    def _():
        yr = accr_ref[...] + br_ref[...]
        yi = acci_ref[...] + bi_ref[...]
        if act:
            yr = jnp.maximum(yr, 0.0)
            yi = jnp.maximum(yi, 0.0)
        or_ref[...] = yr.astype(or_ref.dtype)
        oi_ref[...] = yi.astype(oi_ref.dtype)


# ------------------------------ init / apply -------------------------------

def linear_block_init(w_r, w_i, b_r, b_i, compute_dtype=None):
    """Pad (and optionally cast) parameters ONCE, at parameter-init time.

    w_r, w_i : (C_in, C_out) pre-transposed weights
    b_r, b_i : (C_out,)      biases
    """
    C_in, C_out = w_r.shape
    tk = _pick_tk(C_in)
    tn = _pick_tn(C_out)
    pad_K = _round_up(C_in, tk)
    pad_N = _round_up(C_out, tn)

    def prep_w(w):
        w = jnp.pad(w, ((0, pad_K - C_in), (0, pad_N - C_out)))
        return w.astype(compute_dtype) if compute_dtype is not None else w

    def prep_b(b):
        b = jnp.pad(b, (0, pad_N - C_out)).reshape(1, pad_N)
        return b.astype(compute_dtype) if compute_dtype is not None else b

    return dict(
        w_r=prep_w(w_r), w_i=prep_w(w_i),
        b_r=prep_b(b_r), b_i=prep_b(b_i),
        c_in=C_in, c_out=C_out,
        pad_k=pad_K, pad_n=pad_N,
        tk=tk, tn=tn,
        compute_dtype=compute_dtype,
    )


def linear_block_apply(params, x_r, x_i, act=True):
    """Pallas LinearBlock.forward with pre-padded params from linear_block_init."""
    B, C_in = x_r.shape
    assert C_in == params["c_in"]
    C_out = params["c_out"]
    pad_K, pad_N = params["pad_k"], params["pad_n"]
    tk, tn = params["tk"], params["tn"]
    out_dtype = x_r.dtype

    tm = _pick_tm(B)
    pad_B = _round_up(B, tm)

    # v7x: make sure the "parallel" (M, N) grid has >= 2 tiles so both
    # TensorCores get work (halving 256/512 keeps pad_N divisibility).
    if (pad_B // tm) * (pad_N // tn) < 2 and tn in (256, 512):
        tn //= 2

    cd = params["compute_dtype"]
    if cd is not None:
        x_r = x_r.astype(cd)
        x_i = x_i.astype(cd)

    # Pad activations only when the shape is not already tile-aligned.
    if pad_B > B or pad_K > C_in:
        pad_cfg = ((0, pad_B - B), (0, pad_K - C_in))
        x_r = jnp.pad(x_r, pad_cfg)
        x_i = jnp.pad(x_i, pad_cfg)

    grid = (pad_B // tm, pad_N // tn, pad_K // tk)

    in_bytes = jnp.dtype(x_r.dtype).itemsize
    out_bytes = jnp.dtype(out_dtype).itemsize
    footprint = _vmem_bytes(tm, tn, tk, in_bytes, out_bytes)
    vmem_limit = int(min(64 * 1024 * 1024, max(32 * 1024 * 1024, 2 * footprint)))

    flops = 8 * pad_B * pad_K * pad_N  # 4 matmuls, 2*M*K*N each
    bytes_accessed = ((2 * pad_B * pad_K + 2 * pad_K * pad_N) * in_bytes
                      + 2 * pad_B * pad_N * out_bytes)

    kernel = functools.partial(_linear_block_kernel, act=act)

    x_spec = pl.BlockSpec((tm, tk), lambda i, j, k: (i, k))
    w_spec = pl.BlockSpec((tk, tn), lambda i, j, k: (k, j))
    b_spec = pl.BlockSpec((1, tn), lambda i, j, k: (0, j))
    o_spec = pl.BlockSpec((tm, tn), lambda i, j, k: (i, j))

    y_r, y_i = pl.pallas_call(
        kernel,
        out_shape=(jax.ShapeDtypeStruct((pad_B, pad_N), out_dtype),
                   jax.ShapeDtypeStruct((pad_B, pad_N), out_dtype)),
        grid_spec=pltpu.PrefetchScalarGridSpec(
            num_scalar_prefetch=0,
            grid=grid,
            in_specs=[x_spec, x_spec, w_spec, w_spec, b_spec, b_spec],
            out_specs=[o_spec, o_spec],
            scratch_shapes=[pltpu.VMEM((tm, tn), jnp.float32),
                            pltpu.VMEM((tm, tn), jnp.float32)],
        ),
        compiler_params=pltpu.CompilerParams(
            dimension_semantics=("parallel", "parallel", "arbitrary"),
            vmem_limit_bytes=vmem_limit,
        ),
        cost_estimate=pl.CostEstimate(
            flops=flops, transcendentals=0, bytes_accessed=bytes_accessed),
    )(x_r, x_i, params["w_r"], params["w_i"], params["b_r"], params["b_i"])

    if pad_B > B:
        y_r = y_r[:B]
        y_i = y_i[:B]
    if pad_N > C_out:
        y_r = y_r[:, :C_out]
        y_i = y_i[:, :C_out]
    return y_r, y_i


def linear_block(x_r, x_i, w_r, w_i, b_r, b_i, act=True, compute_dtype=None):
    """One-shot convenience wrapper.  For repeated forward calls hoist
    `linear_block_init` out of the hot path and call `linear_block_apply`."""
    params = linear_block_init(w_r, w_i, b_r, b_i, compute_dtype=compute_dtype)
    return linear_block_apply(params, x_r, x_i, act=act)


# -------------------------------- reference --------------------------------

def _reference(x_r, x_i, w_r, w_i, b_r, b_i, act=True):
    yr = x_r @ w_r - x_i @ w_i + b_r
    yi = x_r @ w_i + x_i @ w_r + b_i
    if act:
        yr = jnp.maximum(yr, 0.0)
        yi = jnp.maximum(yi, 0.0)
    return yr, yi


if __name__ == "__main__":
    key = jax.random.PRNGKey(0)
    k_xr, k_xi, k_wr, k_wi, k_br, k_bi = jax.random.split(key, 6)

    B, C_in, C_out = 8, 32, 16  # small shapes consistent with a linear block

    x_r = jax.random.normal(k_xr, (B, C_in), dtype=jnp.float32)
    x_i = jax.random.normal(k_xi, (B, C_in), dtype=jnp.float32)

    # Deterministic parameter init (nn.Linear-style scale), stored (C_in, C_out).
    scale = 1.0 / jnp.sqrt(jnp.float32(C_in))
    w_r = jax.random.uniform(k_wr, (C_in, C_out), jnp.float32, -scale, scale)
    w_i = jax.random.uniform(k_wi, (C_in, C_out), jnp.float32, -scale, scale)
    b_r = jax.random.uniform(k_br, (C_out,), jnp.float32, -scale, scale)
    b_i = jax.random.uniform(k_bi, (C_out,), jnp.float32, -scale, scale)

    # Parameters fused/padded once (hoisted out of the per-call path).
    params = linear_block_init(w_r, w_i, b_r, b_i)

    # act=True (ReLU) path
    y_r, y_i = linear_block_apply(params, x_r, x_i, act=True)
    jax.block_until_ready((y_r, y_i))
    ref_r, ref_i = _reference(x_r, x_i, w_r, w_i, b_r, b_i, act=True)
    assert jnp.allclose(y_r, ref_r, atol=1e-5, rtol=1e-5)
    assert jnp.allclose(y_i, ref_i, atol=1e-5, rtol=1e-5)

    # act=False (Identity) path
    z_r, z_i = linear_block_apply(params, x_r, x_i, act=False)
    jax.block_until_ready((z_r, z_i))
    rz_r, rz_i = _reference(x_r, x_i, w_r, w_i, b_r, b_i, act=False)
    assert jnp.allclose(z_r, rz_r, atol=1e-5, rtol=1e-5)
    assert jnp.allclose(z_i, rz_i, atol=1e-5, rtol=1e-5)

    print("KERNEL_OK")
</pallas_src>

<mosaic_0001>
module attributes {stable_mosaic.version = 11 : i64} {
  func.func @_linear_block_kernel(%arg0: i32, %arg1: i32, %arg2: i32, %arg3: memref<8x32xf32, #tpu.memory_space<vmem>>, %arg4: memref<8x32xf32, #tpu.memory_space<vmem>>, %arg5: memref<32x128xf32, #tpu.memory_space<vmem>>, %arg6: memref<32x128xf32, #tpu.memory_space<vmem>>, %arg7: memref<1x128xf32, #tpu.memory_space<vmem>>, %arg8: memref<1x128xf32, #tpu.memory_space<vmem>>, %arg9: memref<8x128xf32, #tpu.memory_space<vmem>>, %arg10: memref<8x128xf32, #tpu.memory_space<vmem>>, %arg11: memref<8x128xf32, #tpu.memory_space<vmem>>, %arg12: memref<8x128xf32, #tpu.memory_space<vmem>>) attributes {dimension_semantics = [#tpu.dimension_semantics<parallel>, #tpu.dimension_semantics<parallel>, #tpu.dimension_semantics<arbitrary>], iteration_bounds = array<i64: 1, 1, 1>, scalar_prefetch = 0 : i64, scratch_operands = 2 : i64, tpu.core_type = #tpu.core_type<tc>, window_params = [{transform_indices = @transform_0, window_bounds = array<i64: 8, 32>}, {transform_indices = @transform_1, window_bounds = array<i64: 8, 32>}, {transform_indices = @transform_2, window_bounds = array<i64: 32, 128>}, {transform_indices = @transform_3, window_bounds = array<i64: 32, 128>}, {transform_indices = @transform_4, window_bounds = array<i64: 1, 128>}, {transform_indices = @transform_5, window_bounds = array<i64: 1, 128>}, {transform_indices = @transform_6, window_bounds = array<i64: 8, 128>}, {transform_indices = @transform_7, window_bounds = array<i64: 8, 128>}]} {
    %c0_i32 = arith.constant 0 : i32
    %0 = arith.cmpi eq, %arg2, %c0_i32 : i32
    %1 = arith.extui %0 : i1 to i32
    %c0_i32_0 = arith.constant 0 : i32
    %2 = arith.cmpi ne, %1, %c0_i32_0 : i32
    scf.if %2 {
      %cst_21 = arith.constant 0.000000e+00 : f32
      %22 = vector.broadcast %cst_21 : f32 to vector<8x128xf32>
      %c0_22 = arith.constant 0 : index
      %c0_23 = arith.constant 0 : index
      %23 = vector.load %arg11[%c0_22, %c0_23] : memref<8x128xf32, #tpu.memory_space<vmem>>, vector<8x128xf32>
      tpu.vector_store %arg11[%c0_22, %c0_23], %22 {strides = array<i32>} : memref<8x128xf32, #tpu.memory_space<vmem>>, vector<8x128xf32>,
      %cst_24 = arith.constant 0.000000e+00 : f32
      %24 = vector.broadcast %cst_24 : f32 to vector<8x128xf32>
      %c0_25 = arith.constant 0 : index
      %c0_26 = arith.constant 0 : index
      %25 = vector.load %arg12[%c0_25, %c0_26] : memref<8x128xf32, #tpu.memory_space<vmem>>, vector<8x128xf32>
      tpu.vector_store %arg12[%c0_25, %c0_26], %24 {strides = array<i32>} : memref<8x128xf32, #tpu.memory_space<vmem>>, vector<8x128xf32>,
    } else {
    }
    %c0 = arith.constant 0 : index
    %c0_1 = arith.constant 0 : index
    %3 = vector.load %arg3[%c0, %c0_1] : memref<8x32xf32, #tpu.memory_space<vmem>>, vector<8x32xf32>
    %c0_2 = arith.constant 0 : index
    %c0_3 = arith.constant 0 : index
    %4 = vector.load %arg4[%c0_2, %c0_3] : memref<8x32xf32, #tpu.memory_space<vmem>>, vector<8x32xf32>
    %c0_4 = arith.constant 0 : index
    %c0_5 = arith.constant 0 : index
    %5 = vector.load %arg5[%c0_4, %c0_5] : memref<32x128xf32, #tpu.memory_space<vmem>>, vector<32x128xf32>
    %c0_6 = arith.constant 0 : index
    %c0_7 = arith.constant 0 : index
    %6 = vector.load %arg6[%c0_6, %c0_7] : memref<32x128xf32, #tpu.memory_space<vmem>>, vector<32x128xf32>
    %c0_8 = arith.constant 0 : index
    %c0_9 = arith.constant 0 : index
    %7 = vector.load %arg11[%c0_8, %c0_9] : memref<8x128xf32, #tpu.memory_space<vmem>>, vector<8x128xf32>
    %cst = arith.constant dense<0.000000e+00> : vector<8x128xf32>
    %8 = tpu.matmul %3, %5, %cst {dimension_numbers = #tpu.dot_dimension_numbers<[1], [0], [0], [1], [0, 0, 1, 1], [], []>} : vector<8x32xf32>, vector<32x128xf32>, vector<8x128xf32> -> vector<8x128xf32>
    %cst_10 = arith.constant dense<0.000000e+00> : vector<8x128xf32>
    %9 = tpu.matmul %4, %6, %cst_10 {dimension_numbers = #tpu.dot_dimension_numbers<[1], [0], [0], [1], [0, 0, 1, 1], [], []>} : vector<8x32xf32>, vector<32x128xf32>, vector<8x128xf32> -> vector<8x128xf32>
    %10 = arith.subf %8, %9 : vector<8x128xf32>
    %11 = arith.addf %7, %10 : vector<8x128xf32>
    %c0_11 = arith.constant 0 : index
    %c0_12 = arith.constant 0 : index
    %12 = vector.load %arg11[%c0_11, %c0_12] : memref<8x128xf32, #tpu.memory_space<vmem>>, vector<8x128xf32>
    tpu.vector_store %arg11[%c0_11, %c0_12], %11 {strides = array<i32>} : memref<8x128xf32, #tpu.memory_space<vmem>>, vector<8x128xf32>,
    %c0_13 = arith.constant 0 : index
    %c0_14 = arith.constant 0 : index
    %13 = vector.load %arg12[%c0_13, %c0_14] : memref<8x128xf32, #tpu.memory_space<vmem>>, vector<8x128xf32>
    %cst_15 = arith.constant dense<0.000000e+00> : vector<8x128xf32>
    %14 = tpu.matmul %3, %6, %cst_15 {dimension_numbers = #tpu.dot_dimension_numbers<[1], [0], [0], [1], [0, 0, 1, 1], [], []>} : vector<8x32xf32>, vector<32x128xf32>, vector<8x128xf32> -> vector<8x128xf32>
    %cst_16 = arith.constant dense<0.000000e+00> : vector<8x128xf32>
    %15 = tpu.matmul %4, %5, %cst_16 {dimension_numbers = #tpu.dot_dimension_numbers<[1], [0], [0], [1], [0, 0, 1, 1], [], []>} : vector<8x32xf32>, vector<32x128xf32>, vector<8x128xf32> -> vector<8x128xf32>
    %16 = arith.addf %14, %15 : vector<8x128xf32>
    %17 = arith.addf %13, %16 : vector<8x128xf32>
    %c0_17 = arith.constant 0 : index
    %c0_18 = arith.constant 0 : index
    %18 = vector.load %arg12[%c0_17, %c0_18] : memref<8x128xf32, #tpu.memory_space<vmem>>, vector<8x128xf32>
    tpu.vector_store %arg12[%c0_17, %c0_18], %17 {strides = array<i32>} : memref<8x128xf32, #tpu.memory_space<vmem>>, vector<8x128xf32>,
    %c0_i32_19 = arith.constant 0 : i32
    %19 = arith.cmpi eq, %arg2, %c0_i32_19 : i32
    %20 = arith.extui %19 : i1 to i32
    %c0_i32_20 = arith.constant 0 : i32
    %21 = arith.cmpi ne, %20, %c0_i32_20 : i32
    scf.if %21 {
      %c0_21 = arith.constant 0 : index
      %c0_22 = arith.constant 0 : index
      %22 = vector.load %arg11[%c0_21, %c0_22] : memref<8x128xf32, #tpu.memory_space<vmem>>, vector<8x128xf32>
      %c0_23 = arith.constant 0 : index
      %c0_24 = arith.constant 0 : index
      %23 = vector.load %arg7[%c0_23, %c0_24] : memref<1x128xf32, #tpu.memory_space<vmem>>, vector<1x128xf32>
      %24 = vector.broadcast %23 : vector<1x128xf32> to vector<8x128xf32>
      %25 = arith.addf %22, %24 : vector<8x128xf32>
      %c0_25 = arith.constant 0 : index
      %c0_26 = arith.constant 0 : index
      %26 = vector.load %arg12[%c0_25, %c0_26] : memref<8x128xf32, #tpu.memory_space<vmem>>, vector<8x128xf32>
      %c0_27 = arith.constant 0 : index
      %c0_28 = arith.constant 0 : index
      %27 = vector.load %arg8[%c0_27, %c0_28] : memref<1x128xf32, #tpu.memory_space<vmem>>, vector<1x128xf32>
      %28 = vector.broadcast %27 : vector<1x128xf32> to vector<8x128xf32>
      %29 = arith.addf %26, %28 : vector<8x128xf32>
      %cst_29 = arith.constant 0.000000e+00 : f32
      %30 = vector.broadcast %cst_29 : f32 to vector<8x128xf32>
      %31 = arith.maximumf %25, %30 : vector<8x128xf32>
      %cst_30 = arith.constant 0.000000e+00 : f32
      %32 = vector.broadcast %cst_30 : f32 to vector<8x128xf32>
      %33 = arith.maximumf %29, %32 : vector<8x128xf32>
      %c0_31 = arith.constant 0 : index
      %c0_32 = arith.constant 0 : index
      %34 = vector.load %arg9[%c0_31, %c0_32] : memref<8x128xf32, #tpu.memory_space<vmem>>, vector<8x128xf32>
      tpu.vector_store %arg9[%c0_31, %c0_32], %31 {strides = array<i32>} : memref<8x128xf32, #tpu.memory_space<vmem>>, vector<8x128xf32>,
      %c0_33 = arith.constant 0 : index
      %c0_34 = arith.constant 0 : index
      %35 = vector.load %arg10[%c0_33, %c0_34] : memref<8x128xf32, #tpu.memory_space<vmem>>, vector<8x128xf32>
      tpu.vector_store %arg10[%c0_33, %c0_34], %33 {strides = array<i32>} : memref<8x128xf32, #tpu.memory_space<vmem>>, vector<8x128xf32>,
    } else {
    }
    return
  }
  func.func @transform_0(%arg0: i32, %arg1: i32, %arg2: i32) -> (i32, i32) {
    %c0_i32 = arith.constant 0 : i32
    return %arg0, %arg2 : i32, i32
  }
  func.func @transform_1(%arg0: i32, %arg1: i32, %arg2: i32) -> (i32, i32) {
    %c0_i32 = arith.constant 0 : i32
    return %arg0, %arg2 : i32, i32
  }
  func.func @transform_2(%arg0: i32, %arg1: i32, %arg2: i32) -> (i32, i32) {
    %c0_i32 = arith.constant 0 : i32
    return %arg2, %arg1 : i32, i32
  }
  func.func @transform_3(%arg0: i32, %arg1: i32, %arg2: i32) -> (i32, i32) {
    %c0_i32 = arith.constant 0 : i32
    return %arg2, %arg1 : i32, i32
  }
  func.func @transform_4(%arg0: i32, %arg1: i32, %arg2: i32) -> (i32, i32) {
    %c0_i32 = arith.constant 0 : i32
    %c0_i32_0 = arith.constant 0 : i32
    return %c0_i32, %arg1 : i32, i32
  }
  func.func @transform_5(%arg0: i32, %arg1: i32, %arg2: i32) -> (i32, i32) {
    %c0_i32 = arith.constant 0 : i32
    %c0_i32_0 = arith.constant 0 : i32
    return %c0_i32, %arg1 : i32, i32
  }
  func.func @transform_6(%arg0: i32, %arg1: i32, %arg2: i32) -> (i32, i32) {
    %c0_i32 = arith.constant 0 : i32
    return %arg0, %arg1 : i32, i32
  }
  func.func @transform_7(%arg0: i32, %arg1: i32, %arg2: i32) -> (i32, i32) {
    %c0_i32 = arith.constant 0 : i32
    return %arg0, %arg1 : i32, i32
  }
}

</mosaic_0001>

<llo_original>
// kernel: tpu_custom_call.1
$region0: #{tpu_custom_call.1}
  #allocation0 [shape = 'u32[]', space=smem, size = 0x4, offset = 0x4, fixed_abs, tag = 'smem constant byte address 0x4 - core index']
  #allocation1 [shape = 'u32[144,128]{1,0:T(1,128)}', space=vmem, size = 0x12000, scoped, tag = 'internal scratch']
  #allocation2 [shape = 'f32[8,128]{1,0:T(8,128)}', space=vmem, size = 0x1000, scoped, tag = 'scratch operand']
  #allocation3 [shape = 'f32[8,128]{1,0:T(8,128)}', space=vmem, size = 0x1000, scoped, tag = 'scratch operand']
  %s0 = inlined_call_operand.hbm [shape: f32[8,32], index: 0, kind: input, shape index: {}]
  %s1 = inlined_call_operand.hbm [shape: f32[8,32], index: 1, kind: input, shape index: {}]
  %s2 = inlined_call_operand.hbm [shape: f32[32,128], index: 2, kind: input, shape index: {}]
  %s3 = inlined_call_operand.hbm [shape: f32[32,128], index: 3, kind: input, shape index: {}]
  %s4 = inlined_call_operand.vmem [shape: f32[1,128], index: 4, kind: input, shape index: {}]
  %s5 = inlined_call_operand.vmem [shape: f32[1,128], index: 5, kind: input, shape index: {}]
  %s6 = inlined_call_operand.hbm [shape: f32[8,128], index: 6, kind: output, shape index: {0}]
  %s7 = inlined_call_operand.hbm [shape: f32[8,128], index: 7, kind: output, shape index: {1}]
  %8 = xla_tuple %s6, %s7
  %s9 = sld [smem:[#allocation0]]
  $region66: #{tpu_custom_call.1} parent=0
    _
  %s11 = ssub.s32 1, %s9
  %s12 = scalar_select 0, %s11, %s9
  $region1: #{tpu_custom_call.1} parent=0
    #allocation4 [shape = 'u8[4096]{0}', space=vmem, size = 0x1000, scoped, tag = 'input window, operand 0, single buffered']
    #allocation5 [shape = 's32[1]{0}', space=sflag, size = 0x4, scoped, tag = 'scoped memory for tpu_custom_call.1']
    #allocation6 [shape = 's32[1]{0}', space=sflag, size = 0x4, scoped, tag = 'scoped memory for tpu_custom_call.1']
    #allocation7 [shape = 'u8[4096]{0}', space=vmem, size = 0x1000, scoped, tag = 'input window, operand 1, single buffered']
    #allocation8 [shape = 's32[1]{0}', space=sflag, size = 0x4, scoped, tag = 'scoped memory for tpu_custom_call.1']
    #allocation9 [shape = 'u8[16384]{0}', space=vmem, size = 0x4000, scoped, tag = 'input window, operand 2, single buffered']
    #allocation10 [shape = 'u8[16384]{0}', space=vmem, size = 0x4000, scoped, tag = 'input window, operand 3, single buffered']
    #allocation11 [shape = 's32[1]{0}', space=sflag, size = 0x4, scoped, tag = 'scoped memory for tpu_custom_call.1']
    #allocation12 [shape = 'u8[4096]{0}', space=vmem, size = 0x1000, scoped, tag = 'output window, operand 0, single buffered']
    #allocation13 [shape = 'u8[4096]{0}', space=vmem, size = 0x1000, scoped, tag = 'output window, operand 1, single buffered']
    #allocation14 [shape = 's32[1]{0}', space=sflag, size = 0x4, scoped, tag = 'scoped memory for tpu_custom_call.1']
    %13 = vsyncpa [#allocation5], 0
    %14 = vsyncpa [#allocation8], 0
    %15 = vsyncpa [#allocation11], 0
    %16 = vsyncpa [#allocation6], 0
    %17 = vsyncpa [#allocation14], 0
    // Predicated region
    $region2: #{tpu_custom_call.1} parent=1 // pred_check
      _
    $region3: #{tpu_custom_call.1} parent=1 // pred_check_branch
      %19 = sbr.rel (0) target = $region5
    $region4: #{tpu_custom_call.1} parent=1 // pred_region
      %s21 = ssub.s32 128, 128
      %22 = vsyncadd [#allocation5], %s21
      %s24 = sshll.u32 [#allocation4], 4
      %s25 = int_to_ptr.vmem [resolvable:$true] %s24
      %27 = dma.hbm_to_vmem [thread:$0]  %s0, 128, %s25, [#allocation5]
    $region5: #{tpu_custom_call.1} parent=1 // pred_fallthru
      _
    // Predicated region
    $region6: #{tpu_custom_call.1} parent=1 // pred_check
      _
    $region7: #{tpu_custom_call.1} parent=1 // pred_check_branch
      %29 = sbr.rel (0) target = $region9
    $region8: #{tpu_custom_call.1} parent=1 // pred_region
      %s31 = ssub.s32 128, 128
      %32 = vsyncadd [#allocation8], %s31
      %s34 = sshll.u32 [#allocation7], 4
      %s35 = int_to_ptr.vmem [resolvable:$true] %s34
      %37 = dma.hbm_to_vmem [thread:$0]  %s1, 128, %s35, [#allocation8]
    $region9: #{tpu_custom_call.1} parent=1 // pred_fallthru
      _
    // Predicated region
    $region10: #{tpu_custom_call.1} parent=1 // pred_check
      _
    $region11: #{tpu_custom_call.1} parent=1 // pred_check_branch
      %39 = sbr.rel (0) target = $region13
    $region12: #{tpu_custom_call.1} parent=1 // pred_region
      %s41 = ssub.s32 512, 512
      %42 = vsyncadd [#allocation8], %s41
      %s43 = sshll.u32 [#allocation9], 4
      %s44 = int_to_ptr.vmem [resolvable:$true] %s43
      %49 = dma.hbm_to_vmem [thread:$0]  %s2, 512, %s44, [#allocation8], 128, 128, 8
    $region13: #{tpu_custom_call.1} parent=1 // pred_fallthru
      _
    // Predicated region
    $region14: #{tpu_custom_call.1} parent=1 // pred_check
      _
    $region15: #{tpu_custom_call.1} parent=1 // pred_check_branch
      %51 = sbr.rel (0) target = $region17
    $region16: #{tpu_custom_call.1} parent=1 // pred_region
      %s53 = ssub.s32 512, 512
      %54 = vsyncadd [#allocation11], %s53
      %s55 = sshll.u32 [#allocation10], 4
      %s56 = int_to_ptr.vmem [resolvable:$true] %s55
      %61 = dma.hbm_to_vmem [thread:$0]  %s3, 512, %s56, [#allocation11], 128, 128, 8
    $region17: #{tpu_custom_call.1} parent=1 // pred_fallthru
      _
    // Predicated region
    $region18: #{tpu_custom_call.1} parent=1 // pred_check
      _
    $region19: #{tpu_custom_call.1} parent=1 // pred_check_branch
      %63 = sbr.rel (0) target = $region21
    $region20: #{tpu_custom_call.1} parent=1 // pred_region
      _
    $region21: #{tpu_custom_call.1} parent=1 // pred_fallthru
      _
    // Predicated region
    $region22: #{tpu_custom_call.1} parent=1 // pred_check
      _
    $region23: #{tpu_custom_call.1} parent=1 // pred_check_branch
      %65 = sbr.rel (0) target = $region25
    $region24: #{tpu_custom_call.1} parent=1 // pred_region
      _
    $region25: #{tpu_custom_call.1} parent=1 // pred_fallthru
      _
    // Predicated region
    $region26: #{tpu_custom_call.1} parent=1 // pred_check
      _
    $region27: #{tpu_custom_call.1} parent=1 // pred_check_branch
      %67 = sbr.rel (0) target = $region29
    $region28: #{tpu_custom_call.1} parent=1 // pred_region
      %68 = dma.done [#allocation5], 128
    $region29: #{tpu_custom_call.1} parent=1 // pred_fallthru
      _
    // Predicated region
    $region30: #{tpu_custom_call.1} parent=1 // pred_check
      _
    $region31: #{tpu_custom_call.1} parent=1 // pred_check_branch
      %70 = sbr.rel (0) target = $region33
    $region32: #{tpu_custom_call.1} parent=1 // pred_region
      %71 = dma.done [#allocation8], 128
    $region33: #{tpu_custom_call.1} parent=1 // pred_fallthru
      _
    // Predicated region
    $region34: #{tpu_custom_call.1} parent=1 // pred_check
      _
    $region35: #{tpu_custom_call.1} parent=1 // pred_check_branch
      %73 = sbr.rel (0) target = $region37
    $region36: #{tpu_custom_call.1} parent=1 // pred_region
      %74 = dma.done [#allocation8], 512
    $region37: #{tpu_custom_call.1} parent=1 // pred_fallthru
      _
    // Predicated region
    $region38: #{tpu_custom_call.1} parent=1 // pred_check
      _
    $region39: #{tpu_custom_call.1} parent=1 // pred_check_branch
      %76 = sbr.rel (0) target = $region41
    $region40: #{tpu_custom_call.1} parent=1 // pred_region
      %77 = dma.done [#allocation11], 512
    $region41: #{tpu_custom_call.1} parent=1 // pred_fallthru
      _
    %p78 = scmp.eq.s32.totalorder 0, 0
    // Predicated region
    $region42: #{tpu_custom_call.1} parent=1 // pred_check
      %p79 = pneg %p78
    $region43: #{tpu_custom_call.1} parent=1 // pred_check_branch
      %81 = sbr.rel (%p79) target = $region45
    $region44: #{tpu_custom_call.1} parent=1 // pred_region
      %82 = vst [vmem:[#allocation2] sm:$0xff] 0.0
      %83 = vst [vmem:[#allocation3] sm:$0xff] 0.0
    $region45: #{tpu_custom_call.1} parent=1 // pred_fallthru
      _
    %v84 = vld [vmem:[#allocation4] sm:$0xff]
    %v85 = vld [vmem:[#allocation7] sm:$0xff]
    %v86 = vld [vmem:[#allocation9] sm:$0xff]
    %v87 = vld [vmem:[#allocation9 + $0x8] sm:$0xff]
    %v88 = vld [vmem:[#allocation9 + $0x10] sm:$0xff]
    %v89 = vld [vmem:[#allocation9 + $0x18] sm:$0xff]
    %v90 = vld [vmem:[#allocation10] sm:$0xff]
    %v91 = vld [vmem:[#allocation10 + $0x8] sm:$0xff]
    %v92 = vld [vmem:[#allocation10 + $0x10] sm:$0xff]
    %v93 = vld [vmem:[#allocation10 + $0x18] sm:$0xff]
    %v94 = vld [vmem:[#allocation2] sm:$0xff]
    %vm95 = vcmask 261120
    %v97 = vsel %vm95, %v84, 0
    %99 = vmatprep.subr.mxu0 0.0
    %100 = vmatpush1.msra.mxu0 %v86
    %101 = vmatprep.subr.mxu0 0.0
    %102 = vmatpush1.msra.mxu0 %v87
    %103 = vmatprep.subr.mxu0 0.0
    %104 = vmatpush1.msra.mxu0 %v88
    %105 = vmatprep.subr.mxu0 0.0
    %106 = vmatpush1.msra.mxu0 %v89
    %107 = vmatprep.subr.mxu0 0.0
    %108 = vmatpush1.msra.mxu0 0.0
    %109 = vmatprep.subr.mxu0 0.0
    %110 = vmatpush1.msra.mxu0 0.0
    %111 = vmatprep.subr.mxu0 0.0
    %112 = vmatpush1.msra.mxu0 0.0
    %113 = vmatprep.subr.mxu0 0.0
    %114 = vmatpush1.msra.mxu0 0.0
    %115 = vmatprep.subr.mxu0 0.0
    %116 = vmatpush1.msra.mxu0 0.0
    %117 = vmatprep.subr.mxu0 0.0
    %118 = vmatpush1.msra.mxu0 0.0
    %119 = vmatprep.subr.mxu0 0.0
    %120 = vmatpush1.msra.mxu0 0.0
    %121 = vmatprep.subr.mxu0 0.0
    %122 = vmatpush1.msra.mxu0 0.0
    %123 = vmatprep.subr.mxu0 0.0
    %124 = vmatpush1.msra.mxu0 0.0
    %125 = vmatprep.subr.mxu0 0.0
    %126 = vmatpush1.msra.mxu0 0.0
    %127 = vmatprep.subr.mxu0 0.0
    %128 = vmatpush1.msra.mxu0 0.0
    %129 = vmatprep.subr.mxu0 0.0
    %130 = vmatpush1.msra.mxu0 0.0
    %131 = vmatprep.subr.mxu0 0.0
    %132 = vmatpush1.msra.mxu0 0.0
    %133 = vmatprep.subr.mxu0 0.0
    %134 = vmatpush1.msra.mxu0 0.0
    %135 = vmatprep.subr.mxu0 0.0
    %136 = vmatpush1.msra.mxu0 0.0
    %137 = vmatprep.subr.mxu0 0.0
    %138 = vmatpush1.msra.mxu0 0.0
    %139 = vmatprep.subr.mxu0 0.0
    %140 = vmatpush1.msra.mxu0 0.0
    %141 = vmatprep.subr.mxu0 0.0
    %142 = vmatpush1.msra.mxu0 0.0
    %143 = vmatprep.subr.mxu0 0.0
    %144 = vmatpush1.msra.mxu0 0.0
    %145 = vmatprep.subr.mxu0 0.0
    %146 = vmatpush1.msra.mxu0 0.0
    %147 = vmatprep.subr.mxu0 0.0
    %148 = vmatpush1.msra.mxu0 0.0
    %149 = vmatprep.subr.mxu0 0.0
    %150 = vmatpush1.msra.mxu0 0.0
    %151 = vmatprep.subr.mxu0 0.0
    %152 = vmatpush1.msra.mxu0 0.0
    %153 = vmatprep.subr.mxu0 0.0
    %154 = vmatpush1.msra.mxu0 0.0
    %155 = vmatprep.subr.mxu0 0.0
    %156 = vmatpush1.msra.mxu0 0.0
    %157 = vmatprep.subr.mxu0 0.0
    %158 = vmatpush1.msra.mxu0 0.0
    %159 = vmatprep.subr.mxu0 0.0
    %160 = vmatpush1.msra.mxu0 0.0
    %161 = vmatprep.subr.mxu0 0.0
    %162 = vmatpush1.msra.mxu0 0.0
    %163 = vmatprep.mubr.f32.mxu0 0.0
    %164 = vmatmul.mubr.f32.gmra.mrb[0].mxu0 %v97
    %v165 = vpop.f32.mrb[0].mxu0
    %v166 = vadd.f32 0.0, %v165
    %v167 = vpop.f32.mrb[0].mxu0
    %168 = vdwg.mxu0
    %v170 = vsel %vm95, %v85, 0
    %172 = vmatprep.subr.mxu0 0.0
    %173 = vmatpush1.msra.mxu0 %v90
    %174 = vmatprep.subr.mxu0 0.0
    %175 = vmatpush1.msra.mxu0 %v91
    %176 = vmatprep.subr.mxu0 0.0
    %177 = vmatpush1.msra.mxu0 %v92
    %178 = vmatprep.subr.mxu0 0.0
    %179 = vmatpush1.msra.mxu0 %v93
    %180 = vmatprep.subr.mxu0 0.0
    %181 = vmatpush1.msra.mxu0 0.0
    %182 = vmatprep.subr.mxu0 0.0
    %183 = vmatpush1.msra.mxu0 0.0
    %184 = vmatprep.subr.mxu0 0.0
    %185 = vmatpush1.msra.mxu0 0.0
    %186 = vmatprep.subr.mxu0 0.0
    %187 = vmatpush1.msra.mxu0 0.0
    %188 = vmatprep.subr.mxu0 0.0
    %189 = vmatpush1.msra.mxu0 0.0
    %190 = vmatprep.subr.mxu0 0.0
    %191 = vmatpush1.msra.mxu0 0.0
    %192 = vmatprep.subr.mxu0 0.0
    %193 = vmatpush1.msra.mxu0 0.0
    %194 = vmatprep.subr.mxu0 0.0
    %195 = vmatpush1.msra.mxu0 0.0
    %196 = vmatprep.subr.mxu0 0.0
    %197 = vmatpush1.msra.mxu0 0.0
    %198 = vmatprep.subr.mxu0 0.0
    %199 = vmatpush1.msra.mxu0 0.0
    %200 = vmatprep.subr.mxu0 0.0
    %201 = vmatpush1.msra.mxu0 0.0
    %202 = vmatprep.subr.mxu0 0.0
    %203 = vmatpush1.msra.mxu0 0.0
    %204 = vmatprep.subr.mxu0 0.0
    %205 = vmatpush1.msra.mxu0 0.0
    %206 = vmatprep.subr.mxu0 0.0
    %207 = vmatpush1.msra.mxu0 0.0
    %208 = vmatprep.subr.mxu0 0.0
    %209 = vmatpush1.msra.mxu0 0.0
    %210 = vmatprep.subr.mxu0 0.0
    %211 = vmatpush1.msra.mxu0 0.0
    %212 = vmatprep.subr.mxu0 0.0
    %213 = vmatpush1.msra.mxu0 0.0
    %214 = vmatprep.subr.mxu0 0.0
    %215 = vmatpush1.msra.mxu0 0.0
    %216 = vmatprep.subr.mxu0 0.0
    %217 = vmatpush1.msra.mxu0 0.0
    %218 = vmatprep.subr.mxu0 0.0
    %219 = vmatpush1.msra.mxu0 0.0
    %220 = vmatprep.subr.mxu0 0.0
    %221 = vmatpush1.msra.mxu0 0.0
    %222 = vmatprep.subr.mxu0 0.0
    %223 = vmatpush1.msra.mxu0 0.0
    %224 = vmatprep.subr.mxu0 0.0
    %225 = vmatpush1.msra.mxu0 0.0
    %226 = vmatprep.subr.mxu0 0.0
    %227 = vmatpush1.msra.mxu0 0.0
    %228 = vmatprep.subr.mxu0 0.0
    %229 = vmatpush1.msra.mxu0 0.0
    %230 = vmatprep.subr.mxu0 0.0
    %231 = vmatpush1.msra.mxu0 0.0
    %232 = vmatprep.subr.mxu0 0.0
    %233 = vmatpush1.msra.mxu0 0.0
    %234 = vmatprep.subr.mxu0 0.0
    %235 = vmatpush1.msra.mxu0 0.0
    %236 = vmatprep.mubr.f32.mxu0 0.0
    %237 = vmatmul.mubr.f32.gmra.mrb[0].mxu0 %v170
    %v238 = vpop.f32.mrb[0].mxu0
    %v239 = vadd.f32 0.0, %v238
    %v240 = vpop.f32.mrb[0].mxu0
    %241 = vdwg.mxu0
    %v242 = vsub.f32 %v166, %v239
    %v243 = vadd.f32 %v94, %v242
    %244 = vst [vmem:[#allocation2] sm:$0xff] %v243
    %v245 = vld [vmem:[#allocation3] sm:$0xff]
    %246 = vmatprep.subr.mxu0 0.0
    %247 = vmatpush1.msra.mxu0 %v86
    %248 = vmatprep.subr.mxu0 0.0
    %249 = vmatpush1.msra.mxu0 %v87
    %250 = vmatprep.subr.mxu0 0.0
    %251 = vmatpush1.msra.mxu0 %v88
    %252 = vmatprep.subr.mxu0 0.0
    %253 = vmatpush1.msra.mxu0 %v89
    %254 = vmatprep.subr.mxu0 0.0
    %255 = vmatpush1.msra.mxu0 0.0
    %256 = vmatprep.subr.mxu0 0.0
    %257 = vmatpush1.msra.mxu0 0.0
    %258 = vmatprep.subr.mxu0 0.0
    %259 = vmatpush1.msra.mxu0 0.0
    %260 = vmatprep.subr.mxu0 0.0
    %261 = vmatpush1.msra.mxu0 0.0
    %262 = vmatprep.subr.mxu0 0.0
    %263 = vmatpush1.msra.mxu0 0.0
    %264 = vmatprep.subr.mxu0 0.0
    %265 = vmatpush1.msra.mxu0 0.0
    %266 = vmatprep.subr.mxu0 0.0
    %267 = vmatpush1.msra.mxu0 0.0
    %268 = vmatprep.subr.mxu0 0.0
    %269 = vmatpush1.msra.mxu0 0.0
    %270 = vmatprep.subr.mxu0 0.0
    %271 = vmatpush1.msra.mxu0 0.0
    %272 = vmatprep.subr.mxu0 0.0
    %273 = vmatpush1.msra.mxu0 0.0
    %274 = vmatprep.subr.mxu0 0.0
    %275 = vmatpush1.msra.mxu0 0.0
    %276 = vmatprep.subr.mxu0 0.0
    %277 = vmatpush1.msra.mxu0 0.0
    %278 = vmatprep.subr.mxu0 0.0
    %279 = vmatpush1.msra.mxu0 0.0
    %280 = vmatprep.subr.mxu0 0.0
    %281 = vmatpush1.msra.mxu0 0.0
    %282 = vmatprep.subr.mxu0 0.0
    %283 = vmatpush1.msra.mxu0 0.0
    %284 = vmatprep.subr.mxu0 0.0
    %285 = vmatpush1.msra.mxu0 0.0
    %286 = vmatprep.subr.mxu0 0.0
    %287 = vmatpush1.msra.mxu0 0.0
    %288 = vmatprep.subr.mxu0 0.0
    %289 = vmatpush1.msra.mxu0 0.0
    %290 = vmatprep.subr.mxu0 0.0
    %291 = vmatpush1.msra.mxu0 0.0
    %292 = vmatprep.subr.mxu0 0.0
    %293 = vmatpush1.msra.mxu0 0.0
    %294 = vmatprep.subr.mxu0 0.0
    %295 = vmatpush1.msra.mxu0 0.0
    %296 = vmatprep.subr.mxu0 0.0
    %297 = vmatpush1.msra.mxu0 0.0
    %298 = vmatprep.subr.mxu0 0.0
    %299 = vmatpush1.msra.mxu0 0.0
    %300 = vmatprep.subr.mxu0 0.0
    %301 = vmatpush1.msra.mxu0 0.0
    %302 = vmatprep.subr.mxu0 0.0
    %303 = vmatpush1.msra.mxu0 0.0
    %304 = vmatprep.subr.mxu0 0.0
    %305 = vmatpush1.msra.mxu0 0.0
    %306 = vmatprep.subr.mxu0 0.0
    %307 = vmatpush1.msra.mxu0 0.0
    %308 = vmatprep.subr.mxu0 0.0
    %309 = vmatpush1.msra.mxu0 0.0
    %310 = vmatprep.mubr.f32.mxu0 0.0
    %311 = vmatmul.mubr.f32.gmra.mrb[0].mxu0 %v170
    %v312 = vpop.f32.mrb[0].mxu0
    %v313 = vadd.f32 0.0, %v312
    %v314 = vpop.f32.mrb[0].mxu0
    %315 = vdwg.mxu0
    %316 = vmatprep.subr.mxu0 0.0
    %317 = vmatpush1.msra.mxu0 %v90
    %318 = vmatprep.subr.mxu0 0.0
    %319 = vmatpush1.msra.mxu0 %v91
    %320 = vmatprep.subr.mxu0 0.0
    %321 = vmatpush1.msra.mxu0 %v92
    %322 = vmatprep.subr.mxu0 0.0
    %323 = vmatpush1.msra.mxu0 %v93
    %324 = vmatprep.subr.mxu0 0.0
    %325 = vmatpush1.msra.mxu0 0.0
    %326 = vmatprep.subr.mxu0 0.0
    %327 = vmatpush1.msra.mxu0 0.0
    %328 = vmatprep.subr.mxu0 0.0
    %329 = vmatpush1.msra.mxu0 0.0
    %330 = vmatprep.subr.mxu0 0.0
    %331 = vmatpush1.msra.mxu0 0.0
    %332 = vmatprep.subr.mxu0 0.0
    %333 = vmatpush1.msra.mxu0 0.0
    %334 = vmatprep.subr.mxu0 0.0
    %335 = vmatpush1.msra.mxu0 0.0
    %336 = vmatprep.subr.mxu0 0.0
    %337 = vmatpush1.msra.mxu0 0.0
    %338 = vmatprep.subr.mxu0 0.0
    %339 = vmatpush1.msra.mxu0 0.0
    %340 = vmatprep.subr.mxu0 0.0
    %341 = vmatpush1.msra.mxu0 0.0
    %342 = vmatprep.subr.mxu0 0.0
    %343 = vmatpush1.msra.mxu0 0.0
    %344 = vmatprep.subr.mxu0 0.0
    %345 = vmatpush1.msra.mxu0 0.0
    %346 = vmatprep.subr.mxu0 0.0
    %347 = vmatpush1.msra.mxu0 0.0
    %348 = vmatprep.subr.mxu0 0.0
    %349 = vmatpush1.msra.mxu0 0.0
    %350 = vmatprep.subr.mxu0 0.0
    %351 = vmatpush1.msra.mxu0 0.0
    %352 = vmatprep.subr.mxu0 0.0
    %353 = vmatpush1.msra.mxu0 0.0
    %354 = vmatprep.subr.mxu0 0.0
    %355 = vmatpush1.msra.mxu0 0.0
    %356 = vmatprep.subr.mxu0 0.0
    %357 = vmatpush1.msra.mxu0 0.0
    %358 = vmatprep.subr.mxu0 0.0
    %359 = vmatpush1.msra.mxu0 0.0
    %360 = vmatprep.subr.mxu0 0.0
    %361 = vmatpush1.msra.mxu0 0.0
    %362 = vmatprep.subr.mxu0 0.0
    %363 = vmatpush1.msra.mxu0 0.0
    %364 = vmatprep.subr.mxu0 0.0
    %365 = vmatpush1.msra.mxu0 0.0
    %366 = vmatprep.subr.mxu0 0.0
    %367 = vmatpush1.msra.mxu0 0.0
    %368 = vmatprep.subr.mxu0 0.0
    %369 = vmatpush1.msra.mxu0 0.0
    %370 = vmatprep.subr.mxu0 0.0
    %371 = vmatpush1.msra.mxu0 0.0
    %372 = vmatprep.subr.mxu0 0.0
    %373 = vmatpush1.msra.mxu0 0.0
    %374 = vmatprep.subr.mxu0 0.0
    %375 = vmatpush1.msra.mxu0 0.0
    %376 = vmatprep.subr.mxu0 0.0
    %377 = vmatpush1.msra.mxu0 0.0
    %378 = vmatprep.subr.mxu0 0.0
    %379 = vmatpush1.msra.mxu0 0.0
    %380 = vmatprep.mubr.f32.mxu0 0.0
    %381 = vmatmul.mubr.f32.gmra.mrb[0].mxu0 %v97
    %v382 = vpop.f32.mrb[0].mxu0
    %v383 = vadd.f32 %v313, %v382
    %v384 = vpop.f32.mrb[0].mxu0
    %385 = vdwg.mxu0
    %v386 = vadd.f32 %v245, %v383
    %387 = vst [vmem:[#allocation3] sm:$0xff] %v386
    // Predicated region
    $region46: #{tpu_custom_call.1} parent=1 // pred_check
      %p388 = pneg %p78
    $region47: #{tpu_custom_call.1} parent=1 // pred_check_branch
      %390 = sbr.rel (%p388) target = $region49
    $region48: #{tpu_custom_call.1} parent=1 // pred_region
      %v391 = vld [vmem:[#allocation2] sm:$0xff]
      %v392 = vld [vmem:[%s4] sm:$0x1]
      %v394 = vlaneseq
      %v395 = vshrl.u32 %v394, 7
      %v396 = vsub.s32 0, %v395
      %v397 = vrot.slane %v392, %v396
      %v399 = vadd.f32 %v391, %v397
      %v400 = vld [vmem:[#allocation3] sm:$0xff]
      %v401 = vld [vmem:[%s5] sm:$0x1]
      %v403 = vlaneseq
      %v404 = vshrl.u32 %v403, 7
      %v405 = vsub.s32 0, %v404
      %v406 = vrot.slane %v401, %v405
      %v408 = vadd.f32 %v400, %v406
      %v409 = vmax.f32 %v399, 0.0
      %v410 = vmax.f32 %v408, 0.0
      %411 = vst [vmem:[#allocation12] sm:$0xff] %v409
      %412 = vst [vmem:[#allocation13] sm:$0xff] %v410
    $region49: #{tpu_custom_call.1} parent=1 // pred_fallthru
      _
    // Predicated region
    $region50: #{tpu_custom_call.1} parent=1 // pred_check
      _
    $region51: #{tpu_custom_call.1} parent=1 // pred_check_branch
      %414 = sbr.rel (0) target = $region53
    $region52: #{tpu_custom_call.1} parent=1 // pred_region
      %s416 = ssub.s32 128, 128
      %417 = vsyncadd [#allocation6], %s416
      %s419 = sshll.u32 [#allocation12], 4
      %s420 = int_to_ptr.vmem [resolvable:$true] %s419
      %422 = dma.vmem_to_hbm [thread:$0]  %s420, 128, %s6, [#allocation6]
    $region53: #{tpu_custom_call.1} parent=1 // pred_fallthru
      _
    // Predicated region
    $region54: #{tpu_custom_call.1} parent=1 // pred_check
      _
    $region55: #{tpu_custom_call.1} parent=1 // pred_check_branch
      %424 = sbr.rel (0) target = $region57
    $region56: #{tpu_custom_call.1} parent=1 // pred_region
      %s426 = ssub.s32 128, 128
      %427 = vsyncadd [#allocation14], %s426
      %s429 = sshll.u32 [#allocation13], 4
      %s430 = int_to_ptr.vmem [resolvable:$true] %s429
      %432 = dma.vmem_to_hbm [thread:$0]  %s430, 128, %s7, [#allocation14]
    $region57: #{tpu_custom_call.1} parent=1 // pred_fallthru
      _
    // Predicated region
    $region58: #{tpu_custom_call.1} parent=1 // pred_check
      _
    $region59: #{tpu_custom_call.1} parent=1 // pred_check_branch
      %434 = sbr.rel (0) target = $region61
    $region60: #{tpu_custom_call.1} parent=1 // pred_region
      %435 = dma.done [#allocation6], 128
    $region61: #{tpu_custom_call.1} parent=1 // pred_fallthru
      _
    // Predicated region
    $region62: #{tpu_custom_call.1} parent=1 // pred_check
      _
    $region63: #{tpu_custom_call.1} parent=1 // pred_check_branch
      %437 = sbr.rel (0) target = $region65
    $region64: #{tpu_custom_call.1} parent=1 // pred_region
      %438 = dma.done [#allocation14], 128
    $region65: #{tpu_custom_call.1} parent=1 // pred_fallthru
      _
    %439 = vsyncpa [#allocation5], 1
    %440 = vsyncpa [#allocation8], 1
    %441 = vsyncpa [#allocation11], 1
    %442 = vsyncpa [#allocation6], 1
    %443 = vsyncpa [#allocation14], 1

</llo_original>
